<compile_context>
chip_gen: v6e
topology: v6e:2x2x1
jax: 0.10.0
libtpu: 0.0.40
codegen_flags: <defaults>
</compile_context>

<pallas_src>
import functools

import jax
import jax.numpy as jnp
from jax.experimental import pallas as pl
from jax.experimental.pallas import tpu as pltpu


def _dma_identity_kernel(x_hbm, o_hbm, sem):
    # One whole-array HBM->HBM DMA.  No VMEM staging, no tiling constraints.
    cp = pltpu.make_async_copy(x_hbm, o_hbm, sem)
    cp.start()
    cp.wait()


@functools.lru_cache(maxsize=None)
def _build_dma_copy(shape: tuple, dtype_name: str):
    """Build (once per shape/dtype) a jitted HBM->HBM identity-copy kernel."""
    dtype = jnp.dtype(dtype_name)
    call = pl.pallas_call(
        _dma_identity_kernel,
        out_shape=jax.ShapeDtypeStruct(shape, dtype),
        in_specs=[pl.BlockSpec(memory_space=pl.ANY)],
        out_specs=pl.BlockSpec(memory_space=pl.ANY),
        scratch_shapes=[pltpu.SemaphoreType.DMA(())],
    )
    return jax.jit(call)


def pallas_identity_copy(a: jax.Array) -> jax.Array:
    """Materialized identity: fresh buffer produced by a single HBM->HBM DMA.

    Works for any shape/dtype (no lane/sublane constraints since nothing is
    staged through VMEM).  Zero-size arrays are returned aliased.
    """
    if a.size == 0:
        return a
    fn = _build_dma_copy(tuple(a.shape), jnp.dtype(a.dtype).name)
    return fn(a)


class LayerToDevice:
    """JAX/Pallas counterpart of the PyTorch LayerToDevice module.

    The wrapped layer's parameters are stored but never used in forward,
    matching the reference module.  By default the forward aliases its inputs
    (zero-copy, fastest possible identity).  Pass ``materialize=True`` to get
    fresh buffers produced by the Pallas HBM->HBM DMA kernel.
    """

    def __init__(self, device, layer_params):
        self.D = device
        self.layer = [layer_params]
        self._placed = False

    def __call__(self, *args, materialize=False):
        # Placement side-effect analogue of `self.layer[0].to(self.D)`.
        # torch's .to() is a no-op once parameters already live on the device,
        # so we only pay the (potentially synchronizing) device_put once.
        if not self._placed:
            self.layer[0] = jax.tree_util.tree_map(
                lambda p: jax.device_put(p, self.D), self.layer[0]
            )
            self._placed = True

        if materialize:
            outs = tuple(pallas_identity_copy(a) for a in args)
        else:
            outs = args  # aliased identity: zero bytes moved (roofline)

        if len(outs) == 1:
            return outs[0]
        return outs


if __name__ == "__main__":
    key = jax.random.PRNGKey(0)
    k_x, k_w, k_b = jax.random.split(key, 3)

    # Example input, NCHW like the PyTorch conv convention.
    x = jax.random.normal(k_x, (2, 4, 16, 16), dtype=jnp.float32)

    # Deterministically-initialized "layer" parameters (never used in forward).
    layer_params = {
        "weight": jax.random.normal(k_w, (32, 32), dtype=jnp.float32) * 0.02,
        "bias": jax.random.normal(k_b, (32,), dtype=jnp.float32) * 0.02,
    }

    device = jax.devices()[0]
    mod = LayerToDevice(device, layer_params)

    # Default aliased passthrough (fastest path, matches torch semantics).
    y = mod(x)
    y = jax.block_until_ready(y)
    assert y.shape == x.shape and y.dtype == x.dtype
    assert bool(jnp.array_equal(y, x))

    # Materialized path: exercises the Pallas HBM->HBM DMA kernel.
    y_copy = jax.block_until_ready(mod(x, materialize=True))
    assert y_copy.shape == x.shape and y_copy.dtype == x.dtype
    assert bool(jnp.array_equal(y_copy, x))

    # Multi-arg passthrough through the kernel.
    x2 = jax.random.normal(jax.random.PRNGKey(1), (2, 8, 16), dtype=jnp.float32)
    outs = jax.block_until_ready(mod(x, x2, materialize=True))
    assert isinstance(outs, tuple) and len(outs) == 2
    assert bool(jnp.array_equal(outs[0], x)) and bool(jnp.array_equal(outs[1], x2))

    # Ragged size (not a multiple of 128): the DMA copy has no tiling
    # constraints, so it handles this directly (no fallback needed).
    x3 = jax.random.normal(jax.random.PRNGKey(2), (3, 5, 7), dtype=jnp.float32)
    y3 = jax.block_until_ready(mod(x3, materialize=True))
    assert bool(jnp.array_equal(y3, x3))

    # bf16 input through the kernel (dtype-generic, cached separately).
    x4 = jax.random.normal(jax.random.PRNGKey(3), (5, 8, 64, 64), dtype=jnp.bfloat16)
    y4 = jax.block_until_ready(mod(x4, materialize=True))
    assert bool(jnp.array_equal(y4, x4))

    print("KERNEL_OK")
</pallas_src>

<mosaic_0001>
module attributes {stable_mosaic.version = 11 : i64} {
  func.func @_dma_identity_kernel(%arg0: memref<2x4x16x16xf32, #tpu.memory_space<any>>, %arg1: memref<2x4x16x16xf32, #tpu.memory_space<any>>, %arg2: memref<!tpu.dma_semaphore, #tpu.memory_space<semaphore_mem>>) attributes {dimension_semantics = [], scalar_prefetch = 0 : i64, scratch_operands = 1 : i64, tpu.core_type = #tpu.core_type<tc>} {
    tpu.enqueue_dma source(%arg0 : memref<2x4x16x16xf32, #tpu.memory_space<any>>) target(%arg1 : memref<2x4x16x16xf32, #tpu.memory_space<any>>) target_semaphore(%arg2 : memref<!tpu.dma_semaphore, #tpu.memory_space<semaphore_mem>>)
    tpu.wait_dma2 semaphore(%arg2 : memref<!tpu.dma_semaphore, #tpu.memory_space<semaphore_mem>>) src(%arg0 : memref<2x4x16x16xf32, #tpu.memory_space<any>>) dst(%arg1 : memref<2x4x16x16xf32, #tpu.memory_space<any>>)
    return
  }
}

</mosaic_0001>

<llo_original>
// kernel: tpu_custom_call.1
$region0: #{tpu_custom_call.1}
  #allocation0 [shape = 'u32[]', space=smem, size = 0x4, offset = 0x4, fixed_abs, tag = 'smem constant byte address 0x4 - core index']
  #allocation1 [shape = 'u32[144,128]{1,0:T(1,128)}', space=vmem, size = 0x12000, scoped, tag = 'internal scratch']
  #allocation2 [shape = 's32[1]{0}', space=sflag, size = 0x4, scoped, tag = 'scratch operand']
  #allocation3 [shape = 's32[]', space=sflag, size = 0x4, offset = 0, fixed_abs, tag = 'sflag constant byte address 0x0 - dummy sync flag']
  #allocation4 [shape = 'u32[0]{0}', space=smem, size = 0, offset = 0, fixed_abs, tag = 'smem constant byte address 0x0 - null']
  %s0 = inlined_call_operand.hbm [shape: f32[2,4,16,16], index: 0, kind: input, shape index: {}]
  %s1 = inlined_call_operand.hbm [shape: f32[2,4,16,16], index: 1, kind: output, shape index: {}]
  %s2 = sld [smem:[#allocation0]]
  $region2: #{tpu_custom_call.1} parent=0
    _
  %s4 = ssub.s32 1, %s2
  %s5 = scalar_select 0, %s4, %s2
  %s7 = sshll.u32 1, 14
  %s8 = sxor.u32 4294967295, %s7
  %12 = dma.general %s0, 2048, %s1, [#allocation2], 131072, [#allocation4], 0, 0
  %s13 = smul.u32 2, 4
  %s14 = smul.u32 %s13, 16
  %s15 = smul.u32 %s14, 1
  %s16 = sshll.u32 %s15, 4
  %17 = dma.done [#allocation2], %s16
  %18 = vsyncmov [#allocation2]
  %s19 = vpop.sfrf %18
  %p20 = scmp.eq.s32.totalorder %s19, 0
  %p21 = pneg %p20
  %23 = shalt.err (%p21)

</llo_original>
